<compile_context>
chip_gen: v7x
topology: tpu7x:2x2x1
jax: 0.10.0
libtpu: 0.0.40
codegen_flags: <defaults>
</compile_context>

<pallas_src>
import math
import jax
import jax.numpy as jnp
from jax.experimental import pallas as pl
from jax.experimental.pallas import tpu as pltpu

_LANES = 128


def _sigmoid(x):
    # Single-EUP sigmoid: 1/(1+exp(-x)) == 0.5*(tanh(x/2)+1)
    return 0.5 * (jnp.tanh(0.5 * x) + 1.0)


def _make_kernel(group_width):
    GW = group_width  # lane-aligned width of each gate group (multiple of 128)

    def kernel(x_ref, w_ref, b_ref, wfc_ref, bfc_ref, o_ref):
        x = x_ref[...]                                              # (B, D) f32

        # One fused MXU dot for both directions, forget gate already dropped.
        # Column layout: [ i_group | g_group | o_group ], each GW (=128) wide,
        # each group = [fwd(H) | bwd(H) | zero-pad].
        gates = jnp.dot(x, w_ref[...],
                        preferred_element_type=jnp.float32) + b_ref[...]  # (B, 3*GW)

        # 128-lane-aligned slices: zero-cost views, no XLU relayout.
        i = _sigmoid(gates[:, 0 * GW:1 * GW])      # [sig(i_f)|sig(i_b)|0.5-pad]
        g = jnp.tanh(gates[:, 1 * GW:2 * GW])      # [tanh(g_f)|tanh(g_b)|0-pad]
        o = _sigmoid(gates[:, 2 * GW:3 * GW])      # [sig(o_f)|sig(o_b)|0.5-pad]

        # c = i*g (f*c0 == 0), h = o*tanh(c).  Result is [h_fwd|h_bwd|0-pad]:
        # padded lanes are exactly 0.5*tanh(0.5*0) == 0.
        h = o * jnp.tanh(i * g)                                     # (B, GW)

        # FC consumes the padded h directly (zero-padded rows of w_fc_t).
        y = jnp.dot(h, wfc_ref[...],
                    preferred_element_type=jnp.float32) + bfc_ref[...]    # (B, O)
        o_ref[...] = _sigmoid(y) * 44.0 + 1.0

    return kernel


def prepare_params(params, hidden_size):
    """One-time repack of PyTorch-layout params into the kernel layout.

    Lane-aligns each gate group to a multiple of 128 columns (zero-filled),
    drops the dead forget gate, and zero-row-pads the FC weight accordingly.
    Call once and reuse the result for every forward.
    """
    H = hidden_size
    O = params["b_fc"].shape[-1]
    D = params["w_ih_fwd"].shape[-1]
    GW = max(_LANES, ((2 * H + _LANES - 1) // _LANES) * _LANES)

    wf = jnp.asarray(params["w_ih_fwd"], jnp.float32)
    wb = jnp.asarray(params["w_ih_bwd"], jnp.float32)
    bf = jnp.asarray(params["b_ih_fwd"] + params["b_hh_fwd"], jnp.float32)
    bb = jnp.asarray(params["b_ih_bwd"] + params["b_hh_bwd"], jnp.float32)

    def group(idx):
        # gate idx in PyTorch row order: 0 = input, 2 = cell, 3 = output.
        w_cols = jnp.concatenate(
            [wf[idx * H:(idx + 1) * H], wb[idx * H:(idx + 1) * H]], axis=0).T  # (D, 2H)
        b_cols = jnp.concatenate(
            [bf[idx * H:(idx + 1) * H], bb[idx * H:(idx + 1) * H]], axis=0)    # (2H,)
        w_pad = jnp.zeros((D, GW), jnp.float32).at[:, :2 * H].set(w_cols)
        b_pad = jnp.zeros((GW,), jnp.float32).at[:2 * H].set(b_cols)
        return w_pad, b_pad

    wi, bi = group(0)   # input gate
    wg, bg = group(2)   # cell gate
    wo, bo = group(3)   # output gate

    w_packed = jnp.concatenate([wi, wg, wo], axis=1)                 # (D, 3*GW)
    b_packed = jnp.concatenate([bi, bg, bo], axis=0).reshape(1, 3 * GW)

    w_fc_t = jnp.zeros((GW, O), jnp.float32).at[:2 * H, :].set(
        jnp.asarray(params["w_fc"], jnp.float32).T)                  # (GW, O)
    b_fc = jnp.asarray(params["b_fc"], jnp.float32).reshape(1, O)

    return {
        "w_packed": w_packed,
        "b_packed": b_packed,
        "w_fc_t": w_fc_t,
        "b_fc": b_fc,
        "hidden_size": H,
        "output_size": O,
        "group_width": GW,
    }


def bilstm_forward(x, packed):
    """x: (B, D) float32, packed: output of prepare_params. Returns (B, O)."""
    B = x.shape[0]
    O = packed["output_size"]
    GW = packed["group_width"]

    # No grid: total operand footprint is tens of KB, far under scoped VMEM on
    # v5e/v6e/v7x; any grid would just add per-step overhead to this
    # latency-bound kernel.
    vmem = pl.BlockSpec(memory_space=pltpu.MemorySpace.VMEM)

    return pl.pallas_call(
        _make_kernel(GW),
        out_shape=jax.ShapeDtypeStruct((B, O), jnp.float32),
        in_specs=[vmem, vmem, vmem, vmem, vmem],
        out_specs=vmem,
    )(x, packed["w_packed"], packed["b_packed"], packed["w_fc_t"], packed["b_fc"])


def init_params(key, input_size, hidden_size, output_size):
    """Deterministic init matching PyTorch shapes: U(-1/sqrt(H), 1/sqrt(H))."""
    H = hidden_size
    bound_lstm = 1.0 / math.sqrt(H)
    bound_fc = 1.0 / math.sqrt(2 * H)
    ks = jax.random.split(key, 10)
    u = lambda k, shape, b: jax.random.uniform(
        k, shape, dtype=jnp.float32, minval=-b, maxval=b)
    return {
        "w_ih_fwd": u(ks[0], (4 * H, input_size), bound_lstm),
        "w_hh_fwd": u(ks[1], (4 * H, H), bound_lstm),   # unused: h0 == 0
        "b_ih_fwd": u(ks[2], (4 * H,), bound_lstm),
        "b_hh_fwd": u(ks[3], (4 * H,), bound_lstm),
        "w_ih_bwd": u(ks[4], (4 * H, input_size), bound_lstm),
        "w_hh_bwd": u(ks[5], (4 * H, H), bound_lstm),   # unused: h0 == 0
        "b_ih_bwd": u(ks[6], (4 * H,), bound_lstm),
        "b_hh_bwd": u(ks[7], (4 * H,), bound_lstm),
        "w_fc": u(ks[8], (output_size, 2 * H), bound_fc),
        "b_fc": u(ks[9], (output_size,), bound_fc),
    }


def reference_forward(x, params):
    """Pure-JAX reference (same math, PyTorch layout) for a sanity check."""
    H = params["w_hh_fwd"].shape[-1]

    def cell(w_ih, b_ih, b_hh):
        g = x @ w_ih.T + b_ih + b_hh
        i = jax.nn.sigmoid(g[:, 0 * H:1 * H])
        gg = jnp.tanh(g[:, 2 * H:3 * H])
        o = jax.nn.sigmoid(g[:, 3 * H:4 * H])
        return o * jnp.tanh(i * gg)

    h_f = cell(params["w_ih_fwd"], params["b_ih_fwd"], params["b_hh_fwd"])
    h_b = cell(params["w_ih_bwd"], params["b_ih_bwd"], params["b_hh_bwd"])
    h = jnp.concatenate([h_f, h_b], axis=-1)
    y = h @ params["w_fc"].T + params["b_fc"]
    return jax.nn.sigmoid(y) * 44.0 + 1.0


if __name__ == "__main__":
    B, D, H, O = 8, 16, 32, 4          # batch, input_size, hidden_size, output_size

    key = jax.random.PRNGKey(0)
    k_x, k_p = jax.random.split(key)
    x = jax.random.normal(k_x, (B, D), dtype=jnp.float32)
    params = init_params(k_p, D, H, O)

    # Pack weights once (hoisted out of the per-call hot path).
    packed = prepare_params(params, H)
    packed = jax.tree_util.tree_map(
        lambda v: jax.block_until_ready(v) if isinstance(v, jax.Array) else v, packed)

    out = bilstm_forward(x, packed)
    out = jax.block_until_ready(out)

    ref = reference_forward(x, params)
    assert out.shape == (B, O)
    assert jnp.allclose(out, ref, atol=1e-4, rtol=1e-5), "mismatch vs reference"

    print("KERNEL_OK")
</pallas_src>

<mosaic_0001>
module attributes {stable_mosaic.version = 11 : i64} {
  func.func @kernel(%arg0: memref<8x16xf32, #tpu.memory_space<vmem>>, %arg1: memref<16x384xf32, #tpu.memory_space<vmem>>, %arg2: memref<1x384xf32, #tpu.memory_space<vmem>>, %arg3: memref<128x4xf32, #tpu.memory_space<vmem>>, %arg4: memref<1x4xf32, #tpu.memory_space<vmem>>, %arg5: memref<8x4xf32, #tpu.memory_space<vmem>>) attributes {dimension_semantics = [], scalar_prefetch = 0 : i64, scratch_operands = 0 : i64, tpu.core_type = #tpu.core_type<tc>} {
    %c0 = arith.constant 0 : index
    %c0_0 = arith.constant 0 : index
    %0 = vector.load %arg0[%c0, %c0_0] : memref<8x16xf32, #tpu.memory_space<vmem>>, vector<8x16xf32>
    %c0_1 = arith.constant 0 : index
    %c0_2 = arith.constant 0 : index
    %1 = vector.load %arg1[%c0_1, %c0_2] : memref<16x384xf32, #tpu.memory_space<vmem>>, vector<16x384xf32>
    %cst = arith.constant dense<0.000000e+00> : vector<8x384xf32>
    %2 = tpu.matmul %0, %1, %cst {dimension_numbers = #tpu.dot_dimension_numbers<[1], [0], [0], [1], [0, 0, 1, 1], [], []>} : vector<8x16xf32>, vector<16x384xf32>, vector<8x384xf32> -> vector<8x384xf32>
    %c0_3 = arith.constant 0 : index
    %c0_4 = arith.constant 0 : index
    %3 = vector.load %arg2[%c0_3, %c0_4] : memref<1x384xf32, #tpu.memory_space<vmem>>, vector<1x384xf32>
    %4 = vector.broadcast %3 : vector<1x384xf32> to vector<8x384xf32>
    %5 = arith.addf %2, %4 : vector<8x384xf32>
    %6 = vector.extract_strided_slice %5 {offsets = [0, 0], sizes = [8, 128], strides = [1, 1]} : vector<8x384xf32> to vector<8x128xf32>
    %cst_5 = arith.constant 5.000000e-01 : f32
    %7 = vector.broadcast %cst_5 : f32 to vector<8x128xf32>
    %8 = arith.mulf %7, %6 : vector<8x128xf32>
    %9 = math.tanh %8 : vector<8x128xf32>
    %cst_6 = arith.constant 1.000000e+00 : f32
    %10 = vector.broadcast %cst_6 : f32 to vector<8x128xf32>
    %11 = arith.addf %9, %10 : vector<8x128xf32>
    %cst_7 = arith.constant 5.000000e-01 : f32
    %12 = vector.broadcast %cst_7 : f32 to vector<8x128xf32>
    %13 = arith.mulf %12, %11 : vector<8x128xf32>
    %14 = vector.extract_strided_slice %5 {offsets = [0, 128], sizes = [8, 128], strides = [1, 1]} : vector<8x384xf32> to vector<8x128xf32>
    %15 = math.tanh %14 : vector<8x128xf32>
    %16 = vector.extract_strided_slice %5 {offsets = [0, 256], sizes = [8, 128], strides = [1, 1]} : vector<8x384xf32> to vector<8x128xf32>
    %cst_8 = arith.constant 5.000000e-01 : f32
    %17 = vector.broadcast %cst_8 : f32 to vector<8x128xf32>
    %18 = arith.mulf %17, %16 : vector<8x128xf32>
    %19 = math.tanh %18 : vector<8x128xf32>
    %cst_9 = arith.constant 1.000000e+00 : f32
    %20 = vector.broadcast %cst_9 : f32 to vector<8x128xf32>
    %21 = arith.addf %19, %20 : vector<8x128xf32>
    %cst_10 = arith.constant 5.000000e-01 : f32
    %22 = vector.broadcast %cst_10 : f32 to vector<8x128xf32>
    %23 = arith.mulf %22, %21 : vector<8x128xf32>
    %24 = arith.mulf %13, %15 : vector<8x128xf32>
    %25 = math.tanh %24 : vector<8x128xf32>
    %26 = arith.mulf %23, %25 : vector<8x128xf32>
    %c0_11 = arith.constant 0 : index
    %c0_12 = arith.constant 0 : index
    %27 = vector.load %arg3[%c0_11, %c0_12] : memref<128x4xf32, #tpu.memory_space<vmem>>, vector<128x4xf32>
    %cst_13 = arith.constant dense<0.000000e+00> : vector<8x4xf32>
    %28 = tpu.matmul %26, %27, %cst_13 {dimension_numbers = #tpu.dot_dimension_numbers<[1], [0], [0], [1], [0, 0, 1, 1], [], []>} : vector<8x128xf32>, vector<128x4xf32>, vector<8x4xf32> -> vector<8x4xf32>
    %c0_14 = arith.constant 0 : index
    %c0_15 = arith.constant 0 : index
    %29 = vector.load %arg4[%c0_14, %c0_15] : memref<1x4xf32, #tpu.memory_space<vmem>>, vector<1x4xf32>
    %30 = vector.broadcast %29 : vector<1x4xf32> to vector<8x4xf32>
    %31 = arith.addf %28, %30 : vector<8x4xf32>
    %cst_16 = arith.constant 5.000000e-01 : f32
    %32 = vector.broadcast %cst_16 : f32 to vector<8x4xf32>
    %33 = arith.mulf %32, %31 : vector<8x4xf32>
    %34 = math.tanh %33 : vector<8x4xf32>
    %cst_17 = arith.constant 1.000000e+00 : f32
    %35 = vector.broadcast %cst_17 : f32 to vector<8x4xf32>
    %36 = arith.addf %34, %35 : vector<8x4xf32>
    %cst_18 = arith.constant 5.000000e-01 : f32
    %37 = vector.broadcast %cst_18 : f32 to vector<8x4xf32>
    %38 = arith.mulf %37, %36 : vector<8x4xf32>
    %cst_19 = arith.constant 4.400000e+01 : f32
    %39 = vector.broadcast %cst_19 : f32 to vector<8x4xf32>
    %40 = arith.mulf %38, %39 : vector<8x4xf32>
    %cst_20 = arith.constant 1.000000e+00 : f32
    %41 = vector.broadcast %cst_20 : f32 to vector<8x4xf32>
    %42 = arith.addf %40, %41 : vector<8x4xf32>
    %c0_21 = arith.constant 0 : index
    %c0_22 = arith.constant 0 : index
    %43 = vector.load %arg5[%c0_21, %c0_22] : memref<8x4xf32, #tpu.memory_space<vmem>>, vector<8x4xf32>
    tpu.vector_store %arg5[%c0_21, %c0_22], %42 {strides = array<i32>} : memref<8x4xf32, #tpu.memory_space<vmem>>, vector<8x4xf32>,
    return
  }
}

</mosaic_0001>

<llo_original>
// kernel: tpu_custom_call.1
$region0: #{tpu_custom_call.1}
  #allocation0 [shape = 'u32[]', space=smem, size = 0x4, offset = 0x4, fixed_abs, tag = 'smem constant byte address 0x4 - core index']
  #allocation1 [shape = 'u32[144,128]{1,0:T(1,128)}', space=vmem, size = 0x12000, scoped, tag = 'internal scratch']
  %s0 = inlined_call_operand.vmem [shape: f32[8,16], index: 0, kind: input, shape index: {}]
  %s1 = inlined_call_operand.vmem [shape: f32[16,384], index: 1, kind: input, shape index: {}]
  %s2 = inlined_call_operand.vmem [shape: f32[1,384], index: 2, kind: input, shape index: {}]
  %s3 = inlined_call_operand.vmem [shape: f32[128,4], index: 3, kind: input, shape index: {}]
  %s4 = inlined_call_operand.vmem [shape: f32[1,4], index: 4, kind: input, shape index: {}]
  %s5 = inlined_call_operand.vmem [shape: f32[8,4], index: 5, kind: output, shape index: {}]
  %s6 = sld [smem:[#allocation0]]
  $region30: #{tpu_custom_call.1} parent=0
    _
  %s8 = ssub.s32 1, %s6
  %s9 = scalar_select 0, %s8, %s6
  // Predicated region
  $region2: #{tpu_custom_call.1} parent=0 // pred_check
    _
  $region3: #{tpu_custom_call.1} parent=0 // pred_check_branch
    %11 = sbr.rel (0) target = $region5
  $region4: #{tpu_custom_call.1} parent=0 // pred_region
    _
  $region5: #{tpu_custom_call.1} parent=0 // pred_fallthru
    _
  // Predicated region
  $region6: #{tpu_custom_call.1} parent=0 // pred_check
    _
  $region7: #{tpu_custom_call.1} parent=0 // pred_check_branch
    %13 = sbr.rel (0) target = $region9
  $region8: #{tpu_custom_call.1} parent=0 // pred_region
    _
  $region9: #{tpu_custom_call.1} parent=0 // pred_fallthru
    _
  // Predicated region
  $region10: #{tpu_custom_call.1} parent=0 // pred_check
    _
  $region11: #{tpu_custom_call.1} parent=0 // pred_check_branch
    %15 = sbr.rel (0) target = $region13
  $region12: #{tpu_custom_call.1} parent=0 // pred_region
    _
  $region13: #{tpu_custom_call.1} parent=0 // pred_fallthru
    _
  // Predicated region
  $region14: #{tpu_custom_call.1} parent=0 // pred_check
    _
  $region15: #{tpu_custom_call.1} parent=0 // pred_check_branch
    %17 = sbr.rel (0) target = $region17
  $region16: #{tpu_custom_call.1} parent=0 // pred_region
    _
  $region17: #{tpu_custom_call.1} parent=0 // pred_fallthru
    _
  // Predicated region
  $region18: #{tpu_custom_call.1} parent=0 // pred_check
    _
  $region19: #{tpu_custom_call.1} parent=0 // pred_check_branch
    %19 = sbr.rel (0) target = $region21
  $region20: #{tpu_custom_call.1} parent=0 // pred_region
    _
  $region21: #{tpu_custom_call.1} parent=0 // pred_fallthru
    _
  %v20 = vld [vmem:[%s0] sm:$0xff]
  %v21 = vld [vmem:[%s1] sm:$0xff]
  %v22 = vld [vmem:[%s1 + $0x8] sm:$0xff]
  %v23 = vld [vmem:[%s1 + $0x10] sm:$0xff]
  %v24 = vld [vmem:[%s1 + $0x18] sm:$0xff]
  %v25 = vld [vmem:[%s1 + $0x20] sm:$0xff]
  %v26 = vld [vmem:[%s1 + $0x28] sm:$0xff]
  %v27 = vld [vmem:[%s2] sm:$0x7]
  %v29 = vlaneseq
  %v30 = vshrl.u32 %v29, 7
  %v31 = vsub.s32 0, %v30
  %v32 = vrot.slane %v27, %v31
  %v33 = vlaneseq
  %v34 = vshrl.u32 %v33, 7
  %v35 = vsub.s32 1, %v34
  %v36 = vrot.slane %v27, %v35
  %v37 = vlaneseq
  %v38 = vshrl.u32 %v37, 7
  %v39 = vsub.s32 2, %v38
  %v40 = vrot.slane %v27, %v39
  %vm44 = vcmask 130048
  %v46 = vsel %vm44, %v20, 0
  %48 = vmatprep.subr.mxu0 %v22
  %49 = vmatpush1.msra.mxu0 %v21
  %50 = vmatprep.subr.mxu0 %v25
  %51 = vmatpush1.msra.mxu0 %v24
  %52 = vmatprep.subr.mxu0 0.0
  %53 = vmatpush1.msra.mxu0 0.0
  %54 = vmatprep.subr.mxu0 0.0
  %55 = vmatpush1.msra.mxu0 0.0
  %56 = vmatprep.subr.mxu0 0.0
  %57 = vmatpush1.msra.mxu0 0.0
  %58 = vmatprep.subr.mxu0 0.0
  %59 = vmatpush1.msra.mxu0 0.0
  %60 = vmatprep.subr.mxu0 0.0
  %61 = vmatpush1.msra.mxu0 0.0
  %62 = vmatprep.subr.mxu0 0.0
  %63 = vmatpush1.msra.mxu0 0.0
  %64 = vmatprep.subr.mxu0 0.0
  %65 = vmatpush1.msra.mxu0 0.0
  %66 = vmatprep.subr.mxu0 0.0
  %67 = vmatpush1.msra.mxu0 0.0
  %68 = vmatprep.subr.mxu0 0.0
  %69 = vmatpush1.msra.mxu0 0.0
  %70 = vmatprep.subr.mxu0 0.0
  %71 = vmatpush1.msra.mxu0 0.0
  %72 = vmatprep.subr.mxu0 0.0
  %73 = vmatpush1.msra.mxu0 0.0
  %74 = vmatprep.subr.mxu0 0.0
  %75 = vmatpush1.msra.mxu0 0.0
  %76 = vmatprep.subr.mxu0 0.0
  %77 = vmatpush1.msra.mxu0 0.0
  %78 = vmatprep.subr.mxu0 0.0
  %79 = vmatpush1.msra.mxu0 0.0
  %80 = vmatprep.subr.mxu0 0.0
  %81 = vmatpush1.msra.mxu0 0.0
  %82 = vmatprep.subr.mxu0 0.0
  %83 = vmatpush1.msra.mxu0 0.0
  %84 = vmatprep.subr.mxu0 0.0
  %85 = vmatpush1.msra.mxu0 0.0
  %86 = vmatprep.subr.mxu0 0.0
  %87 = vmatpush1.msra.mxu0 0.0
  %88 = vmatprep.subr.mxu0 0.0
  %89 = vmatpush1.msra.mxu0 0.0
  %90 = vmatprep.subr.mxu0 0.0
  %91 = vmatpush1.msra.mxu0 0.0
  %92 = vmatprep.subr.mxu0 0.0
  %93 = vmatpush1.msra.mxu0 0.0
  %94 = vmatprep.subr.mxu0 0.0
  %95 = vmatpush1.msra.mxu0 0.0
  %96 = vmatprep.subr.mxu0 0.0
  %97 = vmatpush1.msra.mxu0 0.0
  %98 = vmatprep.subr.mxu0 0.0
  %99 = vmatpush1.msra.mxu0 0.0
  %100 = vmatprep.subr.mxu0 0.0
  %101 = vmatpush1.msra.mxu0 0.0
  %102 = vmatprep.subr.mxu0 0.0
  %103 = vmatpush1.msra.mxu0 0.0
  %104 = vmatprep.subr.mxu0 0.0
  %105 = vmatpush1.msra.mxu0 0.0
  %106 = vmatprep.subr.mxu0 0.0
  %107 = vmatpush1.msra.mxu0 0.0
  %108 = vmatprep.subr.mxu0 0.0
  %109 = vmatpush1.msra.mxu0 0.0
  %110 = vmatprep.subr.mxu0 0.0
  %111 = vmatpush1.msra.mxu0 0.0
  %112 = vmatprep.mubr.f32.mxu0 0.0
  %113 = vmatmul.mubr.f32.gmra.mrb[0].mxu0 %v46
  %v114 = vpop.f32.mrb[0].mxu0
  %v115 = vadd.f32 %v32, %v114
  %v116 = vpop.f32.mrb[0].mxu0
  %v117 = vadd.f32 %v36, %v116
  %118 = vdwg.mxu0
  %119 = vmatprep.subr.mxu0 0.0
  %120 = vmatpush1.msra.mxu0 %v23
  %121 = vmatprep.subr.mxu0 0.0
  %122 = vmatpush1.msra.mxu0 %v26
  %123 = vmatprep.subr.mxu0 0.0
  %124 = vmatpush1.msra.mxu0 0.0
  %125 = vmatprep.subr.mxu0 0.0
  %126 = vmatpush1.msra.mxu0 0.0
  %127 = vmatprep.subr.mxu0 0.0
  %128 = vmatpush1.msra.mxu0 0.0
  %129 = vmatprep.subr.mxu0 0.0
  %130 = vmatpush1.msra.mxu0 0.0
  %131 = vmatprep.subr.mxu0 0.0
  %132 = vmatpush1.msra.mxu0 0.0
  %133 = vmatprep.subr.mxu0 0.0
  %134 = vmatpush1.msra.mxu0 0.0
  %135 = vmatprep.subr.mxu0 0.0
  %136 = vmatpush1.msra.mxu0 0.0
  %137 = vmatprep.subr.mxu0 0.0
  %138 = vmatpush1.msra.mxu0 0.0
  %139 = vmatprep.subr.mxu0 0.0
  %140 = vmatpush1.msra.mxu0 0.0
  %141 = vmatprep.subr.mxu0 0.0
  %142 = vmatpush1.msra.mxu0 0.0
  %143 = vmatprep.subr.mxu0 0.0
  %144 = vmatpush1.msra.mxu0 0.0
  %145 = vmatprep.subr.mxu0 0.0
  %146 = vmatpush1.msra.mxu0 0.0
  %147 = vmatprep.subr.mxu0 0.0
  %148 = vmatpush1.msra.mxu0 0.0
  %149 = vmatprep.subr.mxu0 0.0
  %150 = vmatpush1.msra.mxu0 0.0
  %151 = vmatprep.subr.mxu0 0.0
  %152 = vmatpush1.msra.mxu0 0.0
  %153 = vmatprep.subr.mxu0 0.0
  %154 = vmatpush1.msra.mxu0 0.0
  %155 = vmatprep.subr.mxu0 0.0
  %156 = vmatpush1.msra.mxu0 0.0
  %157 = vmatprep.subr.mxu0 0.0
  %158 = vmatpush1.msra.mxu0 0.0
  %159 = vmatprep.subr.mxu0 0.0
  %160 = vmatpush1.msra.mxu0 0.0
  %161 = vmatprep.subr.mxu0 0.0
  %162 = vmatpush1.msra.mxu0 0.0
  %163 = vmatprep.subr.mxu0 0.0
  %164 = vmatpush1.msra.mxu0 0.0
  %165 = vmatprep.subr.mxu0 0.0
  %166 = vmatpush1.msra.mxu0 0.0
  %167 = vmatprep.subr.mxu0 0.0
  %168 = vmatpush1.msra.mxu0 0.0
  %169 = vmatprep.subr.mxu0 0.0
  %170 = vmatpush1.msra.mxu0 0.0
  %171 = vmatprep.subr.mxu0 0.0
  %172 = vmatpush1.msra.mxu0 0.0
  %173 = vmatprep.subr.mxu0 0.0
  %174 = vmatpush1.msra.mxu0 0.0
  %175 = vmatprep.subr.mxu0 0.0
  %176 = vmatpush1.msra.mxu0 0.0
  %177 = vmatprep.subr.mxu0 0.0
  %178 = vmatpush1.msra.mxu0 0.0
  %179 = vmatprep.subr.mxu0 0.0
  %180 = vmatpush1.msra.mxu0 0.0
  %181 = vmatprep.subr.mxu0 0.0
  %182 = vmatpush1.msra.mxu0 0.0
  %183 = vmatprep.mubr.f32.mxu0 0.0
  %184 = vmatmul.mubr.f32.gmra.mrb[0].mxu0 %v46
  %v185 = vpop.f32.mrb[0].mxu0
  %v186 = vadd.f32 %v40, %v185
  %v187 = vpop.f32.mrb[0].mxu0
  %188 = vdwg.mxu0
  %v189 = vmul.f32 %v115, 0.5
  %v190 = vtanh.pop %v189
  %v191 = vadd.f32 %v190, 1.0
  %v192 = vmul.f32 %v191, 0.5
  %v193 = vtanh.pop %v117
  %v194 = vmul.f32 %v186, 0.5
  %v195 = vtanh.pop %v194
  %v196 = vadd.f32 %v195, 1.0
  %v197 = vmul.f32 %v196, 0.5
  %v198 = vmul.f32 %v192, %v193
  %v199 = vtanh.pop %v198
  %v200 = vmul.f32 %v197, %v199
  %v201 = vld [vmem:[%s3] sm:$0xff]
  %v202 = vld [vmem:[%s3 + $0x8] sm:$0xff]
  %v203 = vld [vmem:[%s3 + $0x10] sm:$0xff]
  %v204 = vld [vmem:[%s3 + $0x18] sm:$0xff]
  %v205 = vld [vmem:[%s3 + $0x20] sm:$0xff]
  %v206 = vld [vmem:[%s3 + $0x28] sm:$0xff]
  %v207 = vld [vmem:[%s3 + $0x30] sm:$0xff]
  %v208 = vld [vmem:[%s3 + $0x38] sm:$0xff]
  %v209 = vld [vmem:[%s3 + $0x40] sm:$0xff]
  %v210 = vld [vmem:[%s3 + $0x48] sm:$0xff]
  %v211 = vld [vmem:[%s3 + $0x50] sm:$0xff]
  %v212 = vld [vmem:[%s3 + $0x58] sm:$0xff]
  %v213 = vld [vmem:[%s3 + $0x60] sm:$0xff]
  %v214 = vld [vmem:[%s3 + $0x68] sm:$0xff]
  %v215 = vld [vmem:[%s3 + $0x70] sm:$0xff]
  %v216 = vld [vmem:[%s3 + $0x78] sm:$0xff]
  %v217 = vld [vmem:[%s4] sm:$0x1]
  %v219 = vlaneseq
  %v220 = vshrl.u32 %v219, 7
  %v221 = vsub.s32 0, %v220
  %v222 = vrot.slane %v217, %v221
  %224 = vmatprep.subr.mxu0 0.0
  %225 = vmatpush1.msra.mxu0 %v201
  %226 = vmatprep.subr.mxu0 0.0
  %227 = vmatpush1.msra.mxu0 %v202
  %228 = vmatprep.subr.mxu0 0.0
  %229 = vmatpush1.msra.mxu0 %v203
  %230 = vmatprep.subr.mxu0 0.0
  %231 = vmatpush1.msra.mxu0 %v204
  %232 = vmatprep.subr.mxu0 0.0
  %233 = vmatpush1.msra.mxu0 %v205
  %234 = vmatprep.subr.mxu0 0.0
  %235 = vmatpush1.msra.mxu0 %v206
  %236 = vmatprep.subr.mxu0 0.0
  %237 = vmatpush1.msra.mxu0 %v207
  %238 = vmatprep.subr.mxu0 0.0
  %239 = vmatpush1.msra.mxu0 %v208
  %240 = vmatprep.subr.mxu0 0.0
  %241 = vmatpush1.msra.mxu0 %v209
  %242 = vmatprep.subr.mxu0 0.0
  %243 = vmatpush1.msra.mxu0 %v210
  %244 = vmatprep.subr.mxu0 0.0
  %245 = vmatpush1.msra.mxu0 %v211
  %246 = vmatprep.subr.mxu0 0.0
  %247 = vmatpush1.msra.mxu0 %v212
  %248 = vmatprep.subr.mxu0 0.0
  %249 = vmatpush1.msra.mxu0 %v213
  %250 = vmatprep.subr.mxu0 0.0
  %251 = vmatpush1.msra.mxu0 %v214
  %252 = vmatprep.subr.mxu0 0.0
  %253 = vmatpush1.msra.mxu0 %v215
  %254 = vmatprep.subr.mxu0 0.0
  %255 = vmatpush1.msra.mxu0 %v216
  %256 = vmatprep.subr.mxu0 0.0
  %257 = vmatpush1.msra.mxu0 0.0
  %258 = vmatprep.subr.mxu0 0.0
  %259 = vmatpush1.msra.mxu0 0.0
  %260 = vmatprep.subr.mxu0 0.0
  %261 = vmatpush1.msra.mxu0 0.0
  %262 = vmatprep.subr.mxu0 0.0
  %263 = vmatpush1.msra.mxu0 0.0
  %264 = vmatprep.subr.mxu0 0.0
  %265 = vmatpush1.msra.mxu0 0.0
  %266 = vmatprep.subr.mxu0 0.0
  %267 = vmatpush1.msra.mxu0 0.0
  %268 = vmatprep.subr.mxu0 0.0
  %269 = vmatpush1.msra.mxu0 0.0
  %270 = vmatprep.subr.mxu0 0.0
  %271 = vmatpush1.msra.mxu0 0.0
  %272 = vmatprep.subr.mxu0 0.0
  %273 = vmatpush1.msra.mxu0 0.0
  %274 = vmatprep.subr.mxu0 0.0
  %275 = vmatpush1.msra.mxu0 0.0
  %276 = vmatprep.subr.mxu0 0.0
  %277 = vmatpush1.msra.mxu0 0.0
  %278 = vmatprep.subr.mxu0 0.0
  %279 = vmatpush1.msra.mxu0 0.0
  %280 = vmatprep.subr.mxu0 0.0
  %281 = vmatpush1.msra.mxu0 0.0
  %282 = vmatprep.subr.mxu0 0.0
  %283 = vmatpush1.msra.mxu0 0.0
  %284 = vmatprep.subr.mxu0 0.0
  %285 = vmatpush1.msra.mxu0 0.0
  %286 = vmatprep.subr.mxu0 0.0
  %287 = vmatpush1.msra.mxu0 0.0
  %288 = vmatprep.mubr.f32.mxu0 0.0
  %289 = vmatmul.mubr.f32.gmra.mrb[0].mxu0 %v200
  %v290 = vpop.f32.mrb[0].mxu0
  %v291 = vadd.f32 %v222, %v290
  %v292 = vpop.f32.mrb[0].mxu0
  %293 = vdwg.mxu0
  %v294 = vmul.f32 %v291, 0.5
  %v295 = vtanh.pop %v294
  %v296 = vadd.f32 %v295, 1.0
  %v297 = vmul.f32 %v296, 0.5
  %v298 = vmul.f32 %v297, 44.0
  %v299 = vadd.f32 %v298, 1.0
  %vm300 = vcmask 31744
  %301 = vst.msk [vmem:[%s5] sm:$0xff] %vm300, %v299
  // Predicated region
  $region22: #{tpu_custom_call.1} parent=0 // pred_check
    _
  $region23: #{tpu_custom_call.1} parent=0 // pred_check_branch
    %303 = sbr.rel (0) target = $region25
  $region24: #{tpu_custom_call.1} parent=0 // pred_region
    _
  $region25: #{tpu_custom_call.1} parent=0 // pred_fallthru
    _
  // Predicated region
  $region26: #{tpu_custom_call.1} parent=0 // pred_check
    _
  $region27: #{tpu_custom_call.1} parent=0 // pred_check_branch
    %305 = sbr.rel (0) target = $region29
  $region28: #{tpu_custom_call.1} parent=0 // pred_region
    _
  $region29: #{tpu_custom_call.1} parent=0 // pred_fallthru
    _

</llo_original>
